<compile_context>
chip_gen: v7x
topology: tpu7x:2x2x1
jax: 0.10.0
libtpu: 0.0.40
codegen_flags: <defaults>
</compile_context>

<pallas_src>
import jax
import jax.numpy as jnp
from jax.experimental import pallas as pl
from jax.experimental.pallas import tpu as pltpu


def _context_weighter_kernel(x_ref, w1_ref, b1_ref, w2_ref, b2_ref, o_ref):
    # Linear 1 (MXU, f32 accumulation) + bias + ReLU (VPU, f32).
    h = jnp.dot(x_ref[...], w1_ref[...], preferred_element_type=jnp.float32)
    h = jnp.maximum(h + b1_ref[...], 0.0)                       # (TB, F) f32

    # Linear 2 (MXU, f32 accumulation) + bias.
    logits = jnp.dot(h.astype(w2_ref.dtype), w2_ref[...],
                     preferred_element_type=jnp.float32)
    logits = logits + b2_ref[...]                               # (TB, S) f32

    # Numerically-stable softmax over seq_len.  Exact divide: downstream
    # consumers get rows summing to 1 and the VPU has huge slack here.
    m = jnp.max(logits, axis=-1, keepdims=True)                 # XLU reduce
    e = jnp.exp(logits - m)                                     # EUP
    denom = jnp.sum(e, axis=-1, keepdims=True)                  # XLU reduce
    o_ref[...] = (e / denom).astype(o_ref.dtype)
    # NOTE: for the ragged last batch tile, OOB rows of x_ref contain undefined
    # padding -> their softmax may be NaN/inf.  Harmless: rows are independent
    # and OOB output rows are masked on store.


def _cdiv(a, b):
    return -(-a // b)


def _round_up(n, m):
    return _cdiv(n, m) * m


def _device_hints():
    """Returns (TensorCores per chip, per-step x-DMA target bytes, VMEM capacity bytes)."""
    kind = ""
    try:
        kind = jax.devices()[0].device_kind.lower()
    except Exception:
        pass
    if "v7" in kind or "7x" in kind:
        cores, dma_target, vmem_default = 2, 4 << 20, 64 << 20     # v7x: 2 TCs, 64 MiB/TC
    elif "v6" in kind:
        cores, dma_target, vmem_default = 1, 2 << 20, 128 << 20    # v6e: ~1.4 TB/s HBM
    else:                                                          # v5e / unknown: conservative
        cores, dma_target, vmem_default = 1, 1 << 20, 128 << 20
    try:
        vmem_cap = int(pltpu.get_tpu_info().vmem_capacity_bytes)
    except Exception:
        vmem_cap = vmem_default
    return cores, dma_target, vmem_cap


def _choose_batch_tile(batch, fs, f, s, x_itemsize, w_itemsize,
                       cores, dma_target, vmem_cap):
    row_bytes = fs * x_itemsize
    # VMEM resident per batch row: double-buffered x tile + double-buffered f32 output.
    per_row = 2 * row_bytes + 2 * s * 4
    weight_bytes = 2 * ((fs * f + f * s) * w_itemsize + (f + s) * 4)
    vmem_budget = (3 * vmem_cap) // 4 - weight_bytes - (4 << 20)   # headroom for scratch
    cap_rows = max(8, (max(per_row, vmem_budget) // per_row) // 8 * 8)

    # Amortize the ~0.35 us/grid-step overhead: per-step x DMA >= dma_target.
    target_rows = _round_up(max(8, _cdiv(dma_target, row_bytes)), 8)
    tb = max(8, min(cap_rows, target_rows))

    # v7x: keep both TensorCores busy with balanced tiles (>= cores tiles,
    # 2*cores when that still keeps the per-step DMA amortized).
    if cores > 1 and batch > 8 * cores:
        balanced = _round_up(_cdiv(batch, cores), 8)
        finer = _round_up(_cdiv(batch, 2 * cores), 8)
        if finer * row_bytes >= dma_target:
            balanced = finer
        tb = min(tb, max(8, balanced))

    # Never larger than the (8-rounded) batch; if one tile covers everything,
    # use block == array dims exactly (always a legal block shape).
    tb = min(tb, _round_up(batch, 8))
    if tb >= batch:
        tb = batch
    return tb


def rem_context_encoder_weighter(features, w1, b1, w2, b2, *, batch_tile=None):
    """features: (B, seq_len, in_features), f32 or bf16.  Returns (B, seq_len) softmax weights."""
    B, S, F = features.shape
    FS = S * F
    x = features.reshape(B, FS)        # == torch.flatten(start_dim=1); no pad, no extra copy

    # Weights are tiny and grid-resident: cast once here to match the streamed dtype.
    w_dt = jnp.bfloat16 if x.dtype == jnp.bfloat16 else jnp.float32
    w1c = w1.astype(w_dt)              # (FS, F)
    w2c = w2.astype(w_dt)              # (F, S)
    b1r = b1.reshape(1, F).astype(jnp.float32)
    b2r = b2.reshape(1, S).astype(jnp.float32)

    cores, dma_target, vmem_cap = _device_hints()
    x_itemsize = jnp.dtype(x.dtype).itemsize
    w_itemsize = jnp.dtype(w_dt).itemsize

    if batch_tile is None:
        TB = _choose_batch_tile(B, FS, F, S, x_itemsize, w_itemsize,
                                cores, dma_target, vmem_cap)
    else:
        TB = min(_round_up(max(1, batch_tile), 8), _round_up(B, 8))
        if TB >= B:
            TB = B
    num_tiles = _cdiv(B, TB)           # ragged last tile: OOB rows masked on store

    # Explicit VMEM request from the real buffer math (v5e default scoped limit is
    # 16 MiB; v7x physical VMEM is 64 MiB per TC -> stay well under).
    vmem_needed = (2 * TB * FS * x_itemsize + 2 * TB * S * 4
                   + 2 * ((FS * F + F * S) * w_itemsize + (F + S) * 4))
    vmem_limit = max(16 << 20, min(int(vmem_needed * 1.25) + (4 << 20),
                                   (3 * vmem_cap) // 4))

    cost = pl.CostEstimate(
        flops=2 * B * FS * F + 2 * B * F * S,
        transcendentals=B * S,
        bytes_accessed=(B * FS * x_itemsize + B * S * 4
                        + (FS * F + F * S) * w_itemsize + (F + S) * 4),
    )

    return pl.pallas_call(
        _context_weighter_kernel,
        out_shape=jax.ShapeDtypeStruct((B, S), jnp.float32),
        grid=(num_tiles,),
        in_specs=[
            pl.BlockSpec((TB, FS), lambda i: (i, 0)),   # streamed x, double-buffered
            pl.BlockSpec((FS, F), lambda i: (0, 0)),    # constant maps: weights stay resident
            pl.BlockSpec((1, F), lambda i: (0, 0)),
            pl.BlockSpec((F, S), lambda i: (0, 0)),
            pl.BlockSpec((1, S), lambda i: (0, 0)),
        ],
        out_specs=pl.BlockSpec((TB, S), lambda i: (i, 0)),
        compiler_params=pltpu.CompilerParams(
            # TODO(synk): profile on v7x to confirm "parallel" shards batch tiles
            # across both TensorCores; if only one TC is active switch to
            # pltpu.CORE_PARALLEL.  No-op on single-TC v5e/v6e.
            dimension_semantics=("parallel",),
            vmem_limit_bytes=int(vmem_limit)),
        cost_estimate=cost,
    )(x, w1c, b1r, w2c, b2r)


def _reference_f32(features, w1, b1, w2, b2):
    x = features.astype(jnp.float32).reshape(features.shape[0], -1)
    h = jnp.maximum(x @ w1 + b1.reshape(1, -1), 0.0)
    logits = h @ w2 + b2.reshape(1, -1)
    return jax.nn.softmax(logits, axis=1)


def _reference_matched_bf16(features, w1, b1, w2, b2):
    # Matches the bf16-input kernel path: bf16 MXU operands, f32 accumulation/elementwise.
    x = features.reshape(features.shape[0], -1).astype(jnp.bfloat16)
    h = jnp.dot(x, w1.astype(jnp.bfloat16), preferred_element_type=jnp.float32)
    h = jnp.maximum(h + b1.reshape(1, -1), 0.0)
    logits = jnp.dot(h.astype(jnp.bfloat16), w2.astype(jnp.bfloat16),
                     preferred_element_type=jnp.float32)
    logits = logits + b2.reshape(1, -1)
    return jax.nn.softmax(logits, axis=1)


if __name__ == "__main__":
    # Small shapes consistent with the module: batch=2, in_features=32, seq_len=8.
    B, S, F = 2, 8, 32
    key = jax.random.PRNGKey(0)
    k_x, k_w1, k_b1, k_w2, k_b2, k_x2 = jax.random.split(key, 6)

    features = jax.random.normal(k_x, (B, S, F), dtype=jnp.float32)

    # nn.Linear-like uniform init, stored pre-transposed (kernel does x @ W + b).
    bound1 = 1.0 / jnp.sqrt(F * S)
    w1 = jax.random.uniform(k_w1, (F * S, F), jnp.float32, -bound1, bound1)
    b1 = jax.random.uniform(k_b1, (F,), jnp.float32, -bound1, bound1)
    bound2 = 1.0 / jnp.sqrt(F)
    w2 = jax.random.uniform(k_w2, (F, S), jnp.float32, -bound2, bound2)
    b2 = jax.random.uniform(k_b2, (S,), jnp.float32, -bound2, bound2)

    out = jax.block_until_ready(rem_context_encoder_weighter(features, w1, b1, w2, b2))
    ref = _reference_f32(features, w1, b1, w2, b2)
    assert out.shape == (B, S)
    assert jnp.allclose(out, ref, atol=2e-2, rtol=0.0)
    assert jnp.allclose(jnp.sum(out, axis=1), 1.0, atol=1e-3)

    # Multi-tile path with a ragged last block (no wrapper-side pad / slice copies).
    B2 = 300
    feats2 = jax.random.normal(k_x2, (B2, S, F), dtype=jnp.float32)
    out2 = jax.block_until_ready(
        rem_context_encoder_weighter(feats2, w1, b1, w2, b2, batch_tile=128))
    ref2 = _reference_f32(feats2, w1, b1, w2, b2)
    assert out2.shape == (B2, S)
    assert jnp.allclose(out2, ref2, atol=2e-2, rtol=0.0)
    assert jnp.allclose(jnp.sum(out2, axis=1), 1.0, atol=1e-3)

    # Optional bf16-input path (halves streamed HBM bytes when the producer emits bf16).
    feats2_bf16 = feats2.astype(jnp.bfloat16)
    out3 = jax.block_until_ready(
        rem_context_encoder_weighter(feats2_bf16, w1, b1, w2, b2))
    ref3 = _reference_matched_bf16(feats2_bf16, w1, b1, w2, b2)
    assert out3.shape == (B2, S)
    assert jnp.allclose(out3, ref3, atol=1e-2, rtol=0.0)
    assert jnp.allclose(jnp.sum(out3, axis=1), 1.0, atol=1e-3)

    print("KERNEL_OK")
</pallas_src>

<mosaic_0001>
module attributes {stable_mosaic.version = 11 : i64} {
  func.func @_context_weighter_kernel(%arg0: i32, %arg1: memref<2x256xf32, #tpu.memory_space<vmem>>, %arg2: memref<256x32xf32, #tpu.memory_space<vmem>>, %arg3: memref<1x32xf32, #tpu.memory_space<vmem>>, %arg4: memref<32x8xf32, #tpu.memory_space<vmem>>, %arg5: memref<1x8xf32, #tpu.memory_space<vmem>>, %arg6: memref<2x8xf32, #tpu.memory_space<vmem>>) attributes {dimension_semantics = [#tpu.dimension_semantics<parallel>], iteration_bounds = array<i64: 1>, scalar_prefetch = 0 : i64, scratch_operands = 0 : i64, tpu.core_type = #tpu.core_type<tc>, window_params = [{transform_indices = @transform_0, window_bounds = array<i64: 2, 256>}, {pipeline_mode = #tpu.pipeline_mode<synchronous>, transform_indices = @transform_1, window_bounds = array<i64: 256, 32>}, {pipeline_mode = #tpu.pipeline_mode<synchronous>, transform_indices = @transform_2, window_bounds = array<i64: 1, 32>}, {pipeline_mode = #tpu.pipeline_mode<synchronous>, transform_indices = @transform_3, window_bounds = array<i64: 32, 8>}, {pipeline_mode = #tpu.pipeline_mode<synchronous>, transform_indices = @transform_4, window_bounds = array<i64: 1, 8>}, {transform_indices = @transform_5, window_bounds = array<i64: 2, 8>}]} {
    %c0 = arith.constant 0 : index
    %c0_0 = arith.constant 0 : index
    %0 = vector.load %arg1[%c0, %c0_0] : memref<2x256xf32, #tpu.memory_space<vmem>>, vector<2x256xf32>
    %c0_1 = arith.constant 0 : index
    %c0_2 = arith.constant 0 : index
    %1 = vector.load %arg2[%c0_1, %c0_2] : memref<256x32xf32, #tpu.memory_space<vmem>>, vector<256x32xf32>
    %cst = arith.constant dense<0.000000e+00> : vector<2x32xf32>
    %2 = tpu.matmul %0, %1, %cst {dimension_numbers = #tpu.dot_dimension_numbers<[1], [0], [0], [1], [0, 0, 1, 1], [], []>} : vector<2x256xf32>, vector<256x32xf32>, vector<2x32xf32> -> vector<2x32xf32>
    %c0_3 = arith.constant 0 : index
    %c0_4 = arith.constant 0 : index
    %3 = vector.load %arg3[%c0_3, %c0_4] : memref<1x32xf32, #tpu.memory_space<vmem>>, vector<1x32xf32>
    %4 = vector.broadcast %3 : vector<1x32xf32> to vector<2x32xf32>
    %5 = arith.addf %2, %4 : vector<2x32xf32>
    %cst_5 = arith.constant 0.000000e+00 : f32
    %6 = vector.broadcast %cst_5 : f32 to vector<2x32xf32>
    %7 = arith.maximumf %5, %6 : vector<2x32xf32>
    %c0_6 = arith.constant 0 : index
    %c0_7 = arith.constant 0 : index
    %8 = vector.load %arg4[%c0_6, %c0_7] : memref<32x8xf32, #tpu.memory_space<vmem>>, vector<32x8xf32>
    %cst_8 = arith.constant dense<0.000000e+00> : vector<2x8xf32>
    %9 = tpu.matmul %7, %8, %cst_8 {dimension_numbers = #tpu.dot_dimension_numbers<[1], [0], [0], [1], [0, 0, 1, 1], [], []>} : vector<2x32xf32>, vector<32x8xf32>, vector<2x8xf32> -> vector<2x8xf32>
    %c0_9 = arith.constant 0 : index
    %c0_10 = arith.constant 0 : index
    %10 = vector.load %arg5[%c0_9, %c0_10] : memref<1x8xf32, #tpu.memory_space<vmem>>, vector<1x8xf32>
    %11 = vector.broadcast %10 : vector<1x8xf32> to vector<2x8xf32>
    %12 = arith.addf %9, %11 : vector<2x8xf32>
    %cst_11 = arith.constant dense<0xFF800000> : vector<2xf32>
    %13 = vector.multi_reduction <maximumf>, %12, %cst_11 [1] : vector<2x8xf32> to vector<2xf32>
    %14 = vector.shape_cast %13 : vector<2xf32> to vector<2x1xf32>
    %15 = vector.broadcast %14 : vector<2x1xf32> to vector<2x8xf32>
    %16 = arith.subf %12, %15 : vector<2x8xf32>
    %17 = math.exp %16 : vector<2x8xf32>
    %cst_12 = arith.constant dense<0.000000e+00> : vector<2xf32>
    %18 = vector.multi_reduction <add>, %17, %cst_12 [1] : vector<2x8xf32> to vector<2xf32>
    %19 = vector.shape_cast %18 : vector<2xf32> to vector<2x1xf32>
    %20 = vector.broadcast %19 : vector<2x1xf32> to vector<2x8xf32>
    %21 = arith.divf %17, %20 : vector<2x8xf32>
    %c0_13 = arith.constant 0 : index
    %c0_14 = arith.constant 0 : index
    %22 = vector.load %arg6[%c0_13, %c0_14] : memref<2x8xf32, #tpu.memory_space<vmem>>, vector<2x8xf32>
    tpu.vector_store %arg6[%c0_13, %c0_14], %21 {strides = array<i32>} : memref<2x8xf32, #tpu.memory_space<vmem>>, vector<2x8xf32>,
    return
  }
  func.func @transform_0(%arg0: i32) -> (i32, i32) {
    %c0_i32 = arith.constant 0 : i32
    %c0_i32_0 = arith.constant 0 : i32
    return %arg0, %c0_i32 : i32, i32
  }
  func.func @transform_1(%arg0: i32) -> (i32, i32) {
    %c0_i32 = arith.constant 0 : i32
    %c0_i32_0 = arith.constant 0 : i32
    %c0_i32_1 = arith.constant 0 : i32
    return %c0_i32, %c0_i32_0 : i32, i32
  }
  func.func @transform_2(%arg0: i32) -> (i32, i32) {
    %c0_i32 = arith.constant 0 : i32
    %c0_i32_0 = arith.constant 0 : i32
    %c0_i32_1 = arith.constant 0 : i32
    return %c0_i32, %c0_i32_0 : i32, i32
  }
  func.func @transform_3(%arg0: i32) -> (i32, i32) {
    %c0_i32 = arith.constant 0 : i32
    %c0_i32_0 = arith.constant 0 : i32
    %c0_i32_1 = arith.constant 0 : i32
    return %c0_i32, %c0_i32_0 : i32, i32
  }
  func.func @transform_4(%arg0: i32) -> (i32, i32) {
    %c0_i32 = arith.constant 0 : i32
    %c0_i32_0 = arith.constant 0 : i32
    %c0_i32_1 = arith.constant 0 : i32
    return %c0_i32, %c0_i32_0 : i32, i32
  }
  func.func @transform_5(%arg0: i32) -> (i32, i32) {
    %c0_i32 = arith.constant 0 : i32
    %c0_i32_0 = arith.constant 0 : i32
    return %arg0, %c0_i32 : i32, i32
  }
}

</mosaic_0001>

<llo_original>
// kernel: tpu_custom_call.1
$region0: #{tpu_custom_call.1}
  #allocation0 [shape = 'u32[]', space=smem, size = 0x4, offset = 0x4, fixed_abs, tag = 'smem constant byte address 0x4 - core index']
  #allocation1 [shape = 'u32[144,128]{1,0:T(1,128)}', space=vmem, size = 0x12000, scoped, tag = 'internal scratch']
  %s0 = inlined_call_operand.vmem [shape: f32[2,256], index: 0, kind: input, shape index: {}]
  %s1 = inlined_call_operand.vmem [shape: f32[256,32], index: 1, kind: input, shape index: {}]
  %s2 = inlined_call_operand.vmem [shape: f32[1,32], index: 2, kind: input, shape index: {}]
  %s3 = inlined_call_operand.vmem [shape: f32[32,8], index: 3, kind: input, shape index: {}]
  %s4 = inlined_call_operand.vmem [shape: f32[1,8], index: 4, kind: input, shape index: {}]
  %s5 = inlined_call_operand.hbm [shape: f32[2,8], index: 5, kind: output, shape index: {}]
  %s6 = sld [smem:[#allocation0]]
  $region30: #{tpu_custom_call.1} parent=0
    _
  %s8 = ssub.s32 1, %s6
  %s9 = scalar_select 0, %s8, %s6
  $region1: #{tpu_custom_call.1} parent=0
    #allocation2 [shape = 'u8[1024]{0}', space=vmem, size = 0x400, scoped, tag = 'output window, operand 0, single buffered']
    #allocation3 [shape = 's32[1]{0}', space=sflag, size = 0x4, scoped, tag = 'scoped memory for tpu_custom_call.1']
    %10 = vsyncpa [#allocation3], 0
    // Predicated region
    $region2: #{tpu_custom_call.1} parent=1 // pred_check
      _
    $region3: #{tpu_custom_call.1} parent=1 // pred_check_branch
      %12 = sbr.rel (0) target = $region5
    $region4: #{tpu_custom_call.1} parent=1 // pred_region
      _
    $region5: #{tpu_custom_call.1} parent=1 // pred_fallthru
      _
    // Predicated region
    $region6: #{tpu_custom_call.1} parent=1 // pred_check
      _
    $region7: #{tpu_custom_call.1} parent=1 // pred_check_branch
      %14 = sbr.rel (0) target = $region9
    $region8: #{tpu_custom_call.1} parent=1 // pred_region
      _
    $region9: #{tpu_custom_call.1} parent=1 // pred_fallthru
      _
    // Predicated region
    $region10: #{tpu_custom_call.1} parent=1 // pred_check
      _
    $region11: #{tpu_custom_call.1} parent=1 // pred_check_branch
      %16 = sbr.rel (0) target = $region13
    $region12: #{tpu_custom_call.1} parent=1 // pred_region
      _
    $region13: #{tpu_custom_call.1} parent=1 // pred_fallthru
      _
    // Predicated region
    $region14: #{tpu_custom_call.1} parent=1 // pred_check
      _
    $region15: #{tpu_custom_call.1} parent=1 // pred_check_branch
      %18 = sbr.rel (0) target = $region17
    $region16: #{tpu_custom_call.1} parent=1 // pred_region
      _
    $region17: #{tpu_custom_call.1} parent=1 // pred_fallthru
      _
    // Predicated region
    $region18: #{tpu_custom_call.1} parent=1 // pred_check
      _
    $region19: #{tpu_custom_call.1} parent=1 // pred_check_branch
      %20 = sbr.rel (0) target = $region21
    $region20: #{tpu_custom_call.1} parent=1 // pred_region
      _
    $region21: #{tpu_custom_call.1} parent=1 // pred_fallthru
      _
    %v21 = vld [vmem:[%s0] sm:$0xf]
    %v22 = vld [vmem:[%s1] sm:$0xff]
    %v23 = vld [vmem:[%s1 + $0x8] sm:$0xff]
    %v24 = vld [vmem:[%s1 + $0x10] sm:$0xff]
    %v25 = vld [vmem:[%s1 + $0x18] sm:$0xff]
    %v26 = vld [vmem:[%s1 + $0x20] sm:$0xff]
    %v27 = vld [vmem:[%s1 + $0x28] sm:$0xff]
    %v28 = vld [vmem:[%s1 + $0x30] sm:$0xff]
    %v29 = vld [vmem:[%s1 + $0x38] sm:$0xff]
    %v30 = vld [vmem:[%s1 + $0x40] sm:$0xff]
    %v31 = vld [vmem:[%s1 + $0x48] sm:$0xff]
    %v32 = vld [vmem:[%s1 + $0x50] sm:$0xff]
    %v33 = vld [vmem:[%s1 + $0x58] sm:$0xff]
    %v34 = vld [vmem:[%s1 + $0x60] sm:$0xff]
    %v35 = vld [vmem:[%s1 + $0x68] sm:$0xff]
    %v36 = vld [vmem:[%s1 + $0x70] sm:$0xff]
    %v37 = vld [vmem:[%s1 + $0x78] sm:$0xff]
    %v38 = vld [vmem:[%s1 + $0x80] sm:$0xff]
    %v39 = vld [vmem:[%s1 + $0x88] sm:$0xff]
    %v40 = vld [vmem:[%s1 + $0x90] sm:$0xff]
    %v41 = vld [vmem:[%s1 + $0x98] sm:$0xff]
    %v42 = vld [vmem:[%s1 + $0xa0] sm:$0xff]
    %v43 = vld [vmem:[%s1 + $0xa8] sm:$0xff]
    %v44 = vld [vmem:[%s1 + $0xb0] sm:$0xff]
    %v45 = vld [vmem:[%s1 + $0xb8] sm:$0xff]
    %v46 = vld [vmem:[%s1 + $0xc0] sm:$0xff]
    %v47 = vld [vmem:[%s1 + $0xc8] sm:$0xff]
    %v48 = vld [vmem:[%s1 + $0xd0] sm:$0xff]
    %v49 = vld [vmem:[%s1 + $0xd8] sm:$0xff]
    %v50 = vld [vmem:[%s1 + $0xe0] sm:$0xff]
    %v51 = vld [vmem:[%s1 + $0xe8] sm:$0xff]
    %v52 = vld [vmem:[%s1 + $0xf0] sm:$0xff]
    %v53 = vld [vmem:[%s1 + $0xf8] sm:$0xff]
    %v54 = vld [vmem:[%s2] sm:$0x1]
    %v56 = vlaneseq
    %v57 = vshrl.u32 %v56, 7
    %v58 = vsub.s32 0, %v57
    %v59 = vrot.slane %v54, %v58
    %v63 = vunpack.c.l.s4 1983009808
    %v64 = vunpack.c.0.s8 %v63
    %v65 = vlaneseq
    %v66 = vshrl.u32 %v65, 7
    %v67 = vsub.s32 %v64, %v66
    %v68 = vrot.slane %v21, %v67
    %v69 = vcombine.high %v68, %v68
    %72 = vmatprep.subr.mxu0 0.0
    %73 = vmatpush1.msra.mxu0 %v22
    %74 = vmatprep.subr.mxu0 0.0
    %75 = vmatpush1.msra.mxu0 %v23
    %76 = vmatprep.subr.mxu0 0.0
    %77 = vmatpush1.msra.mxu0 %v24
    %78 = vmatprep.subr.mxu0 0.0
    %79 = vmatpush1.msra.mxu0 %v25
    %80 = vmatprep.subr.mxu0 0.0
    %81 = vmatpush1.msra.mxu0 %v26
    %82 = vmatprep.subr.mxu0 0.0
    %83 = vmatpush1.msra.mxu0 %v27
    %84 = vmatprep.subr.mxu0 0.0
    %85 = vmatpush1.msra.mxu0 %v28
    %86 = vmatprep.subr.mxu0 0.0
    %87 = vmatpush1.msra.mxu0 %v29
    %88 = vmatprep.subr.mxu0 0.0
    %89 = vmatpush1.msra.mxu0 %v30
    %90 = vmatprep.subr.mxu0 0.0
    %91 = vmatpush1.msra.mxu0 %v31
    %92 = vmatprep.subr.mxu0 0.0
    %93 = vmatpush1.msra.mxu0 %v32
    %94 = vmatprep.subr.mxu0 0.0
    %95 = vmatpush1.msra.mxu0 %v33
    %96 = vmatprep.subr.mxu0 0.0
    %97 = vmatpush1.msra.mxu0 %v34
    %98 = vmatprep.subr.mxu0 0.0
    %99 = vmatpush1.msra.mxu0 %v35
    %100 = vmatprep.subr.mxu0 0.0
    %101 = vmatpush1.msra.mxu0 %v36
    %102 = vmatprep.subr.mxu0 0.0
    %103 = vmatpush1.msra.mxu0 %v37
    %104 = vmatprep.subr.mxu0 0.0
    %105 = vmatpush1.msra.mxu0 %v38
    %106 = vmatprep.subr.mxu0 0.0
    %107 = vmatpush1.msra.mxu0 %v39
    %108 = vmatprep.subr.mxu0 0.0
    %109 = vmatpush1.msra.mxu0 %v40
    %110 = vmatprep.subr.mxu0 0.0
    %111 = vmatpush1.msra.mxu0 %v41
    %112 = vmatprep.subr.mxu0 0.0
    %113 = vmatpush1.msra.mxu0 %v42
    %114 = vmatprep.subr.mxu0 0.0
    %115 = vmatpush1.msra.mxu0 %v43
    %116 = vmatprep.subr.mxu0 0.0
    %117 = vmatpush1.msra.mxu0 %v44
    %118 = vmatprep.subr.mxu0 0.0
    %119 = vmatpush1.msra.mxu0 %v45
    %120 = vmatprep.subr.mxu0 0.0
    %121 = vmatpush1.msra.mxu0 %v46
    %122 = vmatprep.subr.mxu0 0.0
    %123 = vmatpush1.msra.mxu0 %v47
    %124 = vmatprep.subr.mxu0 0.0
    %125 = vmatpush1.msra.mxu0 %v48
    %126 = vmatprep.subr.mxu0 0.0
    %127 = vmatpush1.msra.mxu0 %v49
    %128 = vmatprep.subr.mxu0 0.0
    %129 = vmatpush1.msra.mxu0 %v50
    %130 = vmatprep.subr.mxu0 0.0
    %131 = vmatpush1.msra.mxu0 %v51
    %132 = vmatprep.subr.mxu0 0.0
    %133 = vmatpush1.msra.mxu0 %v52
    %134 = vmatprep.subr.mxu0 0.0
    %135 = vmatpush1.msra.mxu0 %v53
    %136 = vmatprep.mubr.f32.mxu0 %v69
    %137 = vmatmul.mubr.f32.gmra.mrb[0].mxu0 %v68
    %v138 = vpop.f32.mrb[0].mxu0
    %v139 = vadd.f32 %v59, %v138
    %v140 = vpop.f32.mrb[0].mxu0
    %141 = vdwg.mxu0
    %v142 = vmax.f32 %v139, 0.0
    %v143 = vld [vmem:[%s3] sm:$0xff]
    %v144 = vld [vmem:[%s3 + $0x8] sm:$0xff]
    %v145 = vld [vmem:[%s3 + $0x10] sm:$0xff]
    %v146 = vld [vmem:[%s3 + $0x18] sm:$0xff]
    %v147 = vld [vmem:[%s4] sm:$0x1]
    %v149 = vlaneseq
    %v150 = vshrl.u32 %v149, 7
    %v151 = vsub.s32 0, %v150
    %v152 = vrot.slane %v147, %v151
    %vm154 = vcmask 261120
    %v156 = vsel %vm154, %v142, 0
    %158 = vmatprep.subr.mxu0 0.0
    %159 = vmatpush1.msra.mxu0 %v143
    %160 = vmatprep.subr.mxu0 0.0
    %161 = vmatpush1.msra.mxu0 %v144
    %162 = vmatprep.subr.mxu0 0.0
    %163 = vmatpush1.msra.mxu0 %v145
    %164 = vmatprep.subr.mxu0 0.0
    %165 = vmatpush1.msra.mxu0 %v146
    %166 = vmatprep.subr.mxu0 0.0
    %167 = vmatpush1.msra.mxu0 0.0
    %168 = vmatprep.subr.mxu0 0.0
    %169 = vmatpush1.msra.mxu0 0.0
    %170 = vmatprep.subr.mxu0 0.0
    %171 = vmatpush1.msra.mxu0 0.0
    %172 = vmatprep.subr.mxu0 0.0
    %173 = vmatpush1.msra.mxu0 0.0
    %174 = vmatprep.subr.mxu0 0.0
    %175 = vmatpush1.msra.mxu0 0.0
    %176 = vmatprep.subr.mxu0 0.0
    %177 = vmatpush1.msra.mxu0 0.0
    %178 = vmatprep.subr.mxu0 0.0
    %179 = vmatpush1.msra.mxu0 0.0
    %180 = vmatprep.subr.mxu0 0.0
    %181 = vmatpush1.msra.mxu0 0.0
    %182 = vmatprep.subr.mxu0 0.0
    %183 = vmatpush1.msra.mxu0 0.0
    %184 = vmatprep.subr.mxu0 0.0
    %185 = vmatpush1.msra.mxu0 0.0
    %186 = vmatprep.subr.mxu0 0.0
    %187 = vmatpush1.msra.mxu0 0.0
    %188 = vmatprep.subr.mxu0 0.0
    %189 = vmatpush1.msra.mxu0 0.0
    %190 = vmatprep.subr.mxu0 0.0
    %191 = vmatpush1.msra.mxu0 0.0
    %192 = vmatprep.subr.mxu0 0.0
    %193 = vmatpush1.msra.mxu0 0.0
    %194 = vmatprep.subr.mxu0 0.0
    %195 = vmatpush1.msra.mxu0 0.0
    %196 = vmatprep.subr.mxu0 0.0
    %197 = vmatpush1.msra.mxu0 0.0
    %198 = vmatprep.subr.mxu0 0.0
    %199 = vmatpush1.msra.mxu0 0.0
    %200 = vmatprep.subr.mxu0 0.0
    %201 = vmatpush1.msra.mxu0 0.0
    %202 = vmatprep.subr.mxu0 0.0
    %203 = vmatpush1.msra.mxu0 0.0
    %204 = vmatprep.subr.mxu0 0.0
    %205 = vmatpush1.msra.mxu0 0.0
    %206 = vmatprep.subr.mxu0 0.0
    %207 = vmatpush1.msra.mxu0 0.0
    %208 = vmatprep.subr.mxu0 0.0
    %209 = vmatpush1.msra.mxu0 0.0
    %210 = vmatprep.subr.mxu0 0.0
    %211 = vmatpush1.msra.mxu0 0.0
    %212 = vmatprep.subr.mxu0 0.0
    %213 = vmatpush1.msra.mxu0 0.0
    %214 = vmatprep.subr.mxu0 0.0
    %215 = vmatpush1.msra.mxu0 0.0
    %216 = vmatprep.subr.mxu0 0.0
    %217 = vmatpush1.msra.mxu0 0.0
    %218 = vmatprep.subr.mxu0 0.0
    %219 = vmatpush1.msra.mxu0 0.0
    %220 = vmatprep.subr.mxu0 0.0
    %221 = vmatpush1.msra.mxu0 0.0
    %222 = vmatprep.mubr.f32.mxu0 0.0
    %223 = vmatmul.mubr.f32.gmra.mrb[0].mxu0 %v156
    %v224 = vpop.f32.mrb[0].mxu0
    %v225 = vadd.f32 %v152, %v224
    %v226 = vpop.f32.mrb[0].mxu0
    %227 = vdwg.mxu0
    %vm228 = vcmask 58368
    %v229 = vsel %vm228, %v225, -inf
    %230 = vmax.xlane.f32.xlu0 %v229
    %v231 = vpop.xlane.xlu0 %230
    %v232 = vsub.f32 %v225, %v231
    %v233 = vmul.f32 %v232, 1.442695
    %v234 = vpow.pop %v233
    %v235 = vsel %vm228, %v234, 0.0
    %236 = vadd.xlane.f32.xlu0 %v235
    %v237 = vpop.xlane.xlu0 %236
    %v238 = vrcp.pop %v237
    %v239 = vmul.f32 %v234, %v238
    %240 = vst.msk [vmem:[#allocation2] sm:$0x3] %vm228, %v239
    // Predicated region
    $region22: #{tpu_custom_call.1} parent=1 // pred_check
      _
    $region23: #{tpu_custom_call.1} parent=1 // pred_check_branch
      %242 = sbr.rel (0) target = $region25
    $region24: #{tpu_custom_call.1} parent=1 // pred_region
      %s244 = ssub.s32 32, 32
      %245 = vsyncadd [#allocation3], %s244
      %s247 = sshll.u32 [#allocation2], 4
      %s248 = int_to_ptr.vmem [resolvable:$true] %s247
      %250 = dma.vmem_to_hbm [thread:$0]  %s248, 32, %s5, [#allocation3]
    $region25: #{tpu_custom_call.1} parent=1 // pred_fallthru
      _
    // Predicated region
    $region26: #{tpu_custom_call.1} parent=1 // pred_check
      _
    $region27: #{tpu_custom_call.1} parent=1 // pred_check_branch
      %252 = sbr.rel (0) target = $region29
    $region28: #{tpu_custom_call.1} parent=1 // pred_region
      %253 = dma.done [#allocation3], 32
    $region29: #{tpu_custom_call.1} parent=1 // pred_fallthru
      _
    %254 = vsyncpa [#allocation3], 1

</llo_original>
